<compile_context>
chip_gen: v7x
topology: tpu7x:2x2x1
jax: 0.10.0
libtpu: 0.0.40
codegen_flags: <defaults>
</compile_context>

<pallas_src>
import math
import jax
import jax.numpy as jnp
from jax.experimental import pallas as pl
from jax.experimental.pallas import tpu as pltpu


# ----------------------------------------------------------------------------
# Kernels
# ----------------------------------------------------------------------------

def _fused_kernel(x_ref, w1_ref, b1_ref, alpha_ref, w2_ref, b2_ref, o_ref):
    """One grid step = a batch of Nb images: pool -> gate -> scale.

    x block: (Nb, C, HW).  The two 1x1 "convs" of the gate are tiny
    broadcast-multiplies + lane reductions (VPU/XLU); they never touch the
    MXU (which would be a degenerate width-Nb matmul).
    """
    x = x_ref[...]                                                   # (Nb, C, HW)
    inv_hw = 1.0 / float(x.shape[-1])                                # compile-time const

    # Global average pool over the spatial (lane) axis, accumulated in f32.
    s = jnp.sum(x.astype(jnp.float32), axis=-1) * inv_hw             # (Nb, C)

    # conv1 (1x1 on a 1x1 map): h[n, r] = sum_c W1[r, c] * s[n, c] + b1[r]
    h = jnp.sum(s[:, None, :] * w1_ref[...][None, :, :], axis=-1) + b1_ref[...]   # (Nb, Cr)

    # PReLU with per-channel negative slope.
    h = jnp.where(h >= 0.0, h, alpha_ref[...] * h)                   # (Nb, Cr)

    # conv2: a[n, c] = sum_r W2[c, r] * h[n, r] + b2[c]
    a = jnp.sum(h[:, None, :] * w2_ref[...][None, :, :], axis=-1) + b2_ref[...]   # (Nb, C)
    a = jax.nn.sigmoid(a)                                            # (Nb, C)

    # Broadcast scale in x's dtype (bf16 VALU on v6e/v7x keeps (16,128)
    # packing; f32 inputs stay f32).  Only the tiny gate is cast.
    o_ref[...] = (x * a[:, :, None].astype(x.dtype)).astype(o_ref.dtype)


def _apply_kernel(g_ref, x_ref, o_ref):
    """Gate-apply pass: out = x * gate; gate is one scalar per row (= (n,c)).

    The (row_tile, 1) gate is lane-sparse but tiny; its XLU lane-broadcast is
    hidden under the HBM-streaming slack of the big tile.
    """
    o_ref[...] = (x_ref[...] * g_ref[...].astype(x_ref.dtype)).astype(o_ref.dtype)


# ----------------------------------------------------------------------------
# Hardware introspection / tiling helpers
# ----------------------------------------------------------------------------

def _num_tensorcores():
    try:
        info = pltpu.get_tpu_info()
        for name in ("num_cores", "core_count", "num_tensorcores", "tensorcore_count"):
            v = getattr(info, name, None)
            if v:
                return int(v)
    except Exception:
        pass
    try:
        v = getattr(jax.devices()[0], "num_cores", None)
        if v:
            return int(v)
    except Exception:
        pass
    return 1


def _vmem_capacity_bytes():
    """Per-TensorCore VMEM capacity (conservative default: v7x's 64 MiB)."""
    try:
        cap = int(pltpu.get_tpu_info().vmem_capacity_bytes)
    except Exception:
        return 64 * 2 ** 20
    cores = _num_tensorcores()
    # Guard: if a multi-TC part (v7x) reports per-chip capacity, scale to per-TC.
    if cores > 1 and cap >= 128 * 2 ** 20:
        cap //= cores
    return cap


def _pick_tile(total, candidates, align):
    """Largest aligned candidate <= total.

    Never falls back to an unaligned full extent: non-divisible shapes are
    handled by the caller with a pl.cdiv grid and a masked tail block.  Only
    when the whole axis is smaller than one alignment unit do we return the
    full extent (block == full array dim, which Pallas allows).
    """
    if total <= align:
        return total
    for cand in candidates:
        if cand % align == 0 and cand <= total:
            return cand
    return align


def _vmem_limit(need_bytes, vmem_cap):
    return int(min(max(int(1.5 * need_bytes), 16 * 2 ** 20), int(0.9 * vmem_cap)))


def _fused_batch_size(N, C, HW, Cr, itemsize, vmem_cap, num_cores):
    """Images per fused grid step: fill VMEM, but keep >= ~2 steps per core."""
    per_image = 4 * C * HW * itemsize + 3 * C * max(Cr, 1) * 4
    budget = int(0.6 * vmem_cap) - (1 << 20)
    nb = max(1, budget // max(per_image, 1))
    steps_target = max(2 * num_cores, 2)
    nb = min(nb, max(1, pl.cdiv(N, steps_target)), N, 256)
    return int(nb)


# ----------------------------------------------------------------------------
# Wrappers
# ----------------------------------------------------------------------------

def _channel_attention_fused(x_nchw, w1, b1, alpha, w2, b2, vmem_cap, num_cores):
    """Fused single pass: reads/writes x exactly once (2x HBM traffic)."""
    N, C, H, W = x_nchw.shape
    HW = H * W
    Cr = w1.shape[0]
    itemsize = jnp.dtype(x_nchw.dtype).itemsize

    # Hard guard: if even a single-image block can't fit, fall back (covers a
    # forced two_pass=False on huge feature maps).
    need_one = 4 * C * HW * itemsize + 3 * C * max(Cr, 1) * 4 + (1 << 20)
    if need_one > int(0.9 * vmem_cap):
        return _channel_attention_two_pass(x_nchw, w1, b1, alpha, w2, b2, vmem_cap)

    nb = _fused_batch_size(N, C, HW, Cr, itemsize, vmem_cap, num_cores)
    grid_n = pl.cdiv(N, nb)

    xr = x_nchw.reshape(N, C, HW)

    # Parameters oriented so the gate math is pure lane-reductions.
    w1m = w1.astype(jnp.float32)                    # (Cr, C)
    b1r = b1.reshape(1, Cr).astype(jnp.float32)
    alr = alpha.reshape(1, Cr).astype(jnp.float32)
    w2m = w2.astype(jnp.float32)                    # (C, Cr)
    b2r = b2.reshape(1, C).astype(jnp.float32)

    need = 4 * nb * C * HW * itemsize + 3 * nb * C * max(Cr, 1) * 4 + (1 << 20)

    out = pl.pallas_call(
        _fused_kernel,
        out_shape=jax.ShapeDtypeStruct((N, C, HW), x_nchw.dtype),
        grid_spec=pltpu.PrefetchScalarGridSpec(
            num_scalar_prefetch=0,
            grid=(grid_n,),
            in_specs=[
                pl.BlockSpec((nb, C, HW), lambda b: (b, 0, 0)),   # x (Nb images / step)
                pl.BlockSpec((Cr, C), lambda b: (0, 0)),          # W1
                pl.BlockSpec((1, Cr), lambda b: (0, 0)),          # b1
                pl.BlockSpec((1, Cr), lambda b: (0, 0)),          # PReLU alpha
                pl.BlockSpec((C, Cr), lambda b: (0, 0)),          # W2
                pl.BlockSpec((1, C), lambda b: (0, 0)),           # b2
            ],
            out_specs=pl.BlockSpec((nb, C, HW), lambda b: (b, 0, 0)),
        ),
        compiler_params=pltpu.CompilerParams(
            dimension_semantics=("parallel",),
            vmem_limit_bytes=_vmem_limit(need, vmem_cap),
        ),
    )(xr, w1m, b1r, alr, w2m, b2r)

    return out.reshape(N, C, H, W)


def _channel_attention_two_pass(x_nchw, w1, b1, alpha, w2, b2, vmem_cap):
    """Pool + gate as tiny batched matmuls in JAX; gate-apply as a tiled
    Pallas kernel on x reshaped to (N*C, HW) with a 2-D parallel grid.

    Costs one extra read of x (3x HBM traffic) but keeps per-block VMEM
    small, fills sublanes even for tiny C, and shards across both v7x TCs.
    """
    N, C, H, W = x_nchw.shape
    HW = H * W
    NC = N * C
    itemsize = jnp.dtype(x_nchw.dtype).itemsize

    # Gate path (tiny): (N,C)@(C,Cr) and (N,Cr)@(Cr,C) in f32.
    s = jnp.mean(x_nchw.astype(jnp.float32), axis=(2, 3))                      # (N, C)
    h = s @ w1.T.astype(jnp.float32) + b1.astype(jnp.float32)                  # (N, Cr)
    h = jnp.where(h >= 0.0, h, alpha.astype(jnp.float32) * h)                  # PReLU
    a = jax.nn.sigmoid(h @ w2.T.astype(jnp.float32) + b2.astype(jnp.float32))  # (N, C)
    gate = a.reshape(NC, 1)                                                    # f32, per-row

    x2 = x_nchw.reshape(NC, HW)

    # dtype-aware alignment: bf16 packs 2 rows per sublane -> 16-row multiples.
    row_align = 8 if itemsize >= 4 else 16
    row_tile = _pick_tile(NC, (512, 256, 128, 64, 32, 16, 8), row_align)
    # >=512-lane tiles already hit ~85% of HBM roofline; keep hw_tile <= 2048
    # so double-buffered in+out stays well under v7x's 64 MiB.
    hw_tile = _pick_tile(HW, (2048, 1024, 512, 256, 128), 128)

    need = 4 * row_tile * hw_tile * itemsize + 2 * row_tile * 4 + (1 << 20)

    out = pl.pallas_call(
        _apply_kernel,
        out_shape=jax.ShapeDtypeStruct((NC, HW), x_nchw.dtype),
        grid_spec=pltpu.PrefetchScalarGridSpec(
            num_scalar_prefetch=0,
            grid=(pl.cdiv(NC, row_tile), pl.cdiv(HW, hw_tile)),  # masked tail blocks OK
            in_specs=[
                pl.BlockSpec((row_tile, 1), lambda i, j: (i, 0)),            # gate
                pl.BlockSpec((row_tile, hw_tile), lambda i, j: (i, j)),      # x
            ],
            out_specs=pl.BlockSpec((row_tile, hw_tile), lambda i, j: (i, j)),
        ),
        compiler_params=pltpu.CompilerParams(
            dimension_semantics=("parallel", "parallel"),
            vmem_limit_bytes=_vmem_limit(need, vmem_cap),
        ),
    )(gate, x2)

    return out.reshape(N, C, H, W)


def channel_attention(x_nchw, w1, b1, alpha, w2, b2, *, two_pass=None):
    """x_nchw: (N, C, H, W) float32/bfloat16. Returns same shape/dtype.

    two_pass=None -> auto: fused single pass while a per-image block fits
    ~0.75 of per-TC VMEM and there are enough images to feed every
    TensorCore; otherwise split into pool/gate + tiled apply.
    """
    N, C, H, W = x_nchw.shape
    HW = H * W
    Cr = w1.shape[0]
    vmem_cap = _vmem_capacity_bytes()
    num_cores = _num_tensorcores()
    itemsize = jnp.dtype(x_nchw.dtype).itemsize

    if two_pass is None:
        need_one = 4 * C * HW * itemsize + 3 * C * max(Cr, 1) * 4 + (1 << 20)
        # Fused = 2x HBM traffic vs 3x for two-pass: keep fused while it fits
        # comfortably (relaxed threshold for 128 MiB v5e/v6e parts).
        two_pass = need_one > int(0.75 * vmem_cap)
        # v7x: grid=(N,) with N < num TensorCores leaves a TC idle; the
        # two-pass 2-D grid keeps both streaming.
        if not two_pass and num_cores > 1 and N < num_cores:
            two_pass = True

    if two_pass:
        return _channel_attention_two_pass(x_nchw, w1, b1, alpha, w2, b2, vmem_cap)
    return _channel_attention_fused(x_nchw, w1, b1, alpha, w2, b2, vmem_cap, num_cores)


# ----------------------------------------------------------------------------
# Parameter init (matches the PyTorch module's shapes / init recipes)
# ----------------------------------------------------------------------------

def init_params(key, n_channel, reduction=2):
    Cr = n_channel // reduction
    k1, k2, k3, k4 = jax.random.split(key, 4)

    # conv1.weight: kaiming_normal_, fan_in = n_channel (1x1) -> std = sqrt(2/fan_in)
    w1 = jax.random.normal(k1, (Cr, n_channel), jnp.float32) * math.sqrt(2.0 / n_channel)
    # conv1.bias: default Conv2d init, uniform(+-1/sqrt(fan_in))
    b1 = jax.random.uniform(k2, (Cr,), jnp.float32,
                            minval=-1.0 / math.sqrt(n_channel),
                            maxval=1.0 / math.sqrt(n_channel))
    # PReLU per-channel slope, init 0.1
    alpha = jnp.full((Cr,), 0.1, jnp.float32)
    # conv2.weight: xavier_normal_, std = sqrt(2/(fan_in+fan_out))
    w2 = jax.random.normal(k3, (n_channel, Cr), jnp.float32) * math.sqrt(2.0 / (Cr + n_channel))
    # conv2.bias: default Conv2d init
    b2 = jax.random.uniform(k4, (n_channel,), jnp.float32,
                            minval=-1.0 / math.sqrt(Cr),
                            maxval=1.0 / math.sqrt(Cr))
    return w1, b1, alpha, w2, b2


def channel_attention_ref(x, w1, b1, alpha, w2, b2):
    """Pure-JAX reference of the PyTorch forward (NCHW)."""
    s = jnp.mean(x, axis=(2, 3))                        # (N, C)
    h = s @ w1.T + b1                                   # (N, Cr)
    h = jnp.where(h >= 0, h, alpha * h)                 # PReLU
    a = h @ w2.T + b2                                   # (N, C)
    a = jax.nn.sigmoid(a)
    return x * a[:, :, None, None]


if __name__ == "__main__":
    key = jax.random.PRNGKey(0)
    kx, kp = jax.random.split(key)

    N, C, H, W = 2, 4, 16, 16
    x = jax.random.normal(kx, (N, C, H, W), jnp.float32)
    w1, b1, alpha, w2, b2 = init_params(kp, n_channel=C, reduction=2)

    ref = channel_attention_ref(x, w1, b1, alpha, w2, b2)

    # Auto-selected path.
    out_auto = channel_attention(x, w1, b1, alpha, w2, b2)
    out_auto = jax.block_until_ready(out_auto)
    assert out_auto.shape == (N, C, H, W)
    assert jnp.allclose(out_auto, ref, atol=1e-5, rtol=1e-5), "auto path mismatch"

    # Fused single-pass path.
    out_fused = channel_attention(x, w1, b1, alpha, w2, b2, two_pass=False)
    out_fused = jax.block_until_ready(out_fused)
    assert out_fused.shape == (N, C, H, W)
    assert jnp.allclose(out_fused, ref, atol=1e-5, rtol=1e-5), "fused path mismatch"

    # Two-pass path (used for large feature maps / tight VMEM / tiny N on v7x).
    out_split = channel_attention(x, w1, b1, alpha, w2, b2, two_pass=True)
    out_split = jax.block_until_ready(out_split)
    assert out_split.shape == (N, C, H, W)
    assert jnp.allclose(out_split, ref, atol=1e-5, rtol=1e-5), "two-pass path mismatch"

    print("KERNEL_OK")
</pallas_src>

<mosaic_0001>
module attributes {stable_mosaic.version = 11 : i64} {
  func.func @_fused_kernel(%arg0: i32, %arg1: memref<1x4x256xf32, #tpu.memory_space<vmem>>, %arg2: memref<2x4xf32, #tpu.memory_space<vmem>>, %arg3: memref<1x2xf32, #tpu.memory_space<vmem>>, %arg4: memref<1x2xf32, #tpu.memory_space<vmem>>, %arg5: memref<4x2xf32, #tpu.memory_space<vmem>>, %arg6: memref<1x4xf32, #tpu.memory_space<vmem>>, %arg7: memref<1x4x256xf32, #tpu.memory_space<vmem>>) attributes {dimension_semantics = [#tpu.dimension_semantics<parallel>], iteration_bounds = array<i64: 2>, scalar_prefetch = 0 : i64, scratch_operands = 0 : i64, tpu.core_type = #tpu.core_type<tc>, window_params = [{transform_indices = @transform_0, window_bounds = array<i64: 1, 4, 256>}, {pipeline_mode = #tpu.pipeline_mode<synchronous>, transform_indices = @transform_1, window_bounds = array<i64: 2, 4>}, {pipeline_mode = #tpu.pipeline_mode<synchronous>, transform_indices = @transform_2, window_bounds = array<i64: 1, 2>}, {pipeline_mode = #tpu.pipeline_mode<synchronous>, transform_indices = @transform_3, window_bounds = array<i64: 1, 2>}, {pipeline_mode = #tpu.pipeline_mode<synchronous>, transform_indices = @transform_4, window_bounds = array<i64: 4, 2>}, {pipeline_mode = #tpu.pipeline_mode<synchronous>, transform_indices = @transform_5, window_bounds = array<i64: 1, 4>}, {transform_indices = @transform_6, window_bounds = array<i64: 1, 4, 256>}]} {
    %c0 = arith.constant 0 : index
    %c0_0 = arith.constant 0 : index
    %c0_1 = arith.constant 0 : index
    %0 = vector.load %arg1[%c0, %c0_0, %c0_1] : memref<1x4x256xf32, #tpu.memory_space<vmem>>, vector<1x4x256xf32>
    %cst = arith.constant dense<0.000000e+00> : vector<1x4xf32>
    %1 = vector.multi_reduction <add>, %0, %cst [2] : vector<1x4x256xf32> to vector<1x4xf32>
    %cst_2 = arith.constant 3.906250e-03 : f32
    %2 = vector.broadcast %cst_2 : f32 to vector<1x4xf32>
    %3 = arith.mulf %1, %2 : vector<1x4xf32>
    %4 = vector.shape_cast %3 : vector<1x4xf32> to vector<1x1x4xf32>
    %c0_3 = arith.constant 0 : index
    %c0_4 = arith.constant 0 : index
    %5 = vector.load %arg2[%c0_3, %c0_4] : memref<2x4xf32, #tpu.memory_space<vmem>>, vector<2x4xf32>
    %6 = vector.shape_cast %5 : vector<2x4xf32> to vector<1x2x4xf32>
    %7 = vector.broadcast %4 : vector<1x1x4xf32> to vector<1x2x4xf32>
    %8 = arith.mulf %7, %6 : vector<1x2x4xf32>
    %cst_5 = arith.constant dense<0.000000e+00> : vector<1x2xf32>
    %9 = vector.multi_reduction <add>, %8, %cst_5 [2] : vector<1x2x4xf32> to vector<1x2xf32>
    %c0_6 = arith.constant 0 : index
    %c0_7 = arith.constant 0 : index
    %10 = vector.load %arg3[%c0_6, %c0_7] : memref<1x2xf32, #tpu.memory_space<vmem>>, vector<1x2xf32>
    %11 = arith.addf %9, %10 : vector<1x2xf32>
    %cst_8 = arith.constant 0.000000e+00 : f32
    %12 = vector.broadcast %cst_8 : f32 to vector<1x2xf32>
    %13 = arith.cmpf oge, %11, %12 : vector<1x2xf32>
    %c0_9 = arith.constant 0 : index
    %c0_10 = arith.constant 0 : index
    %14 = vector.load %arg4[%c0_9, %c0_10] : memref<1x2xf32, #tpu.memory_space<vmem>>, vector<1x2xf32>
    %15 = arith.mulf %14, %11 : vector<1x2xf32>
    %16 = arith.select %13, %11, %15 : vector<1x2xi1>, vector<1x2xf32>
    %17 = vector.shape_cast %16 : vector<1x2xf32> to vector<1x1x2xf32>
    %c0_11 = arith.constant 0 : index
    %c0_12 = arith.constant 0 : index
    %18 = vector.load %arg5[%c0_11, %c0_12] : memref<4x2xf32, #tpu.memory_space<vmem>>, vector<4x2xf32>
    %19 = vector.shape_cast %18 : vector<4x2xf32> to vector<1x4x2xf32>
    %20 = vector.broadcast %17 : vector<1x1x2xf32> to vector<1x4x2xf32>
    %21 = arith.mulf %20, %19 : vector<1x4x2xf32>
    %cst_13 = arith.constant dense<0.000000e+00> : vector<1x4xf32>
    %22 = vector.multi_reduction <add>, %21, %cst_13 [2] : vector<1x4x2xf32> to vector<1x4xf32>
    %c0_14 = arith.constant 0 : index
    %c0_15 = arith.constant 0 : index
    %23 = vector.load %arg6[%c0_14, %c0_15] : memref<1x4xf32, #tpu.memory_space<vmem>>, vector<1x4xf32>
    %24 = arith.addf %22, %23 : vector<1x4xf32>
    %25 = arith.negf %24 : vector<1x4xf32>
    %26 = math.exp %25 : vector<1x4xf32>
    %cst_16 = arith.constant 1.000000e+00 : f32
    %27 = vector.broadcast %cst_16 : f32 to vector<1x4xf32>
    %28 = arith.addf %27, %26 : vector<1x4xf32>
    %29 = arith.divf %27, %28 : vector<1x4xf32>
    %30 = vector.shape_cast %29 : vector<1x4xf32> to vector<1x4x1xf32>
    %31 = vector.broadcast %30 : vector<1x4x1xf32> to vector<1x4x256xf32>
    %32 = arith.mulf %0, %31 : vector<1x4x256xf32>
    %c0_17 = arith.constant 0 : index
    %c0_18 = arith.constant 0 : index
    %c0_19 = arith.constant 0 : index
    %33 = vector.load %arg7[%c0_17, %c0_18, %c0_19] : memref<1x4x256xf32, #tpu.memory_space<vmem>>, vector<1x4x256xf32>
    tpu.vector_store %arg7[%c0_17, %c0_18, %c0_19], %32 {strides = array<i32>} : memref<1x4x256xf32, #tpu.memory_space<vmem>>, vector<1x4x256xf32>,
    return
  }
  func.func @transform_0(%arg0: i32) -> (i32, i32, i32) {
    %c0_i32 = arith.constant 0 : i32
    %c0_i32_0 = arith.constant 0 : i32
    %c0_i32_1 = arith.constant 0 : i32
    return %arg0, %c0_i32, %c0_i32_0 : i32, i32, i32
  }
  func.func @transform_1(%arg0: i32) -> (i32, i32) {
    %c0_i32 = arith.constant 0 : i32
    %c0_i32_0 = arith.constant 0 : i32
    %c0_i32_1 = arith.constant 0 : i32
    return %c0_i32, %c0_i32_0 : i32, i32
  }
  func.func @transform_2(%arg0: i32) -> (i32, i32) {
    %c0_i32 = arith.constant 0 : i32
    %c0_i32_0 = arith.constant 0 : i32
    %c0_i32_1 = arith.constant 0 : i32
    return %c0_i32, %c0_i32_0 : i32, i32
  }
  func.func @transform_3(%arg0: i32) -> (i32, i32) {
    %c0_i32 = arith.constant 0 : i32
    %c0_i32_0 = arith.constant 0 : i32
    %c0_i32_1 = arith.constant 0 : i32
    return %c0_i32, %c0_i32_0 : i32, i32
  }
  func.func @transform_4(%arg0: i32) -> (i32, i32) {
    %c0_i32 = arith.constant 0 : i32
    %c0_i32_0 = arith.constant 0 : i32
    %c0_i32_1 = arith.constant 0 : i32
    return %c0_i32, %c0_i32_0 : i32, i32
  }
  func.func @transform_5(%arg0: i32) -> (i32, i32) {
    %c0_i32 = arith.constant 0 : i32
    %c0_i32_0 = arith.constant 0 : i32
    %c0_i32_1 = arith.constant 0 : i32
    return %c0_i32, %c0_i32_0 : i32, i32
  }
  func.func @transform_6(%arg0: i32) -> (i32, i32, i32) {
    %c0_i32 = arith.constant 0 : i32
    %c0_i32_0 = arith.constant 0 : i32
    %c0_i32_1 = arith.constant 0 : i32
    return %arg0, %c0_i32, %c0_i32_0 : i32, i32, i32
  }
}

</mosaic_0001>

<llo_original>
// kernel: tpu_custom_call.1
$region0: #{tpu_custom_call.1}
  #allocation0 [shape = 'u32[]', space=smem, size = 0x4, offset = 0x4, fixed_abs, tag = 'smem constant byte address 0x4 - core index']
  #allocation1 [shape = 'u32[144,128]{1,0:T(1,128)}', space=vmem, size = 0x12000, scoped, tag = 'internal scratch']
  %s0 = inlined_call_operand.hbm [shape: f32[2,4,256], index: 0, kind: input, shape index: {}]
  %s1 = inlined_call_operand.vmem [shape: f32[2,4], index: 1, kind: input, shape index: {}]
  %s2 = inlined_call_operand.vmem [shape: f32[1,2], index: 2, kind: input, shape index: {}]
  %s3 = inlined_call_operand.vmem [shape: f32[1,2], index: 3, kind: input, shape index: {}]
  %s4 = inlined_call_operand.vmem [shape: f32[4,2], index: 4, kind: input, shape index: {}]
  %s5 = inlined_call_operand.vmem [shape: f32[1,4], index: 5, kind: input, shape index: {}]
  %s6 = inlined_call_operand.hbm [shape: f32[2,4,256], index: 6, kind: output, shape index: {}]
  %s7 = sld [smem:[#allocation0]]
  $region61: #{tpu_custom_call.1} parent=0
    _
  %s9 = ssub.s32 1, %s7
  %s10 = scalar_select 0, %s9, %s7
  $region1: #{tpu_custom_call.1} parent=0
    #allocation2 [shape = 'u8[8192]{0}', space=vmem, size = 0x2000, scoped, tag = 'input window, operand 0']
    #allocation3 [shape = 's32[2]{0}', space=sflag, size = 0x8, scoped, tag = 'scoped memory for tpu_custom_call.1']
    #allocation4 [shape = 's32[2]{0}', space=sflag, size = 0x8, scoped, tag = 'scoped memory for tpu_custom_call.1']
    #allocation5 [shape = 'u8[8192]{0}', space=vmem, size = 0x2000, scoped, tag = 'output window, operand 0']
    %11 = vsyncpa [#allocation3], 0
    %s12 = scalar_lea.sflag [#allocation3], 1
    %13 = vsyncpa %s12, 0
    %14 = vsyncpa [#allocation4], 0
    %s15 = scalar_lea.sflag [#allocation4], 1
    %16 = vsyncpa %s15, 0
    loop: start=0, step=1, limit=4
    $region2: #{tpu_custom_call.1} parent=1 // loop_pre_header
      _
    $region3: #{tpu_custom_call.1} parent=1 // loop_header
      %s18 = sphi 0, %s22
      %p19 = scmp.ge.s32.totalorder %s18, 4
      %s28 = sphi 0, %s30
      %s31 = sphi 0, %s28
      %s32 = sphi 0, %s31
      %s48 = sphi 0, %s32
      %s52 = sphi 0, %s52
      %s54 = sphi 0, %s52
      %s55 = sphi 0, %s54
      %s69 = sphi 0, %s55
      %s73 = sphi 0, %s73
      %s75 = sphi 0, %s73
      %s76 = sphi 0, %s75
      %s90 = sphi 0, %s76
      %s94 = sphi 0, %s94
      %s96 = sphi 0, %s94
      %s97 = sphi 0, %s96
      %s111 = sphi 0, %s97
      %s115 = sphi 0, %s115
      %s117 = sphi 0, %s115
      %s118 = sphi 0, %s117
      %s132 = sphi 0, %s118
      %s136 = sphi 0, %s136
      %s138 = sphi 0, %s136
      %s139 = sphi 0, %s138
      %s153 = sphi 0, %s139
      %s159 = sphi 0, %s161
      %s162 = sphi 0, %s159
      %s163 = sphi 0, %s162
      %s179 = sphi 0, %s163
    $region4: #{tpu_custom_call.1} parent=1 // loop_header_branch
      %21 = sbr.rel (%p19) target = $region8
    $region5: #{tpu_custom_call.1} parent=1 // loop_body
      %s23 = ssub.s32 %s18, 1
      %s24 = ssub.s32 %s18, 2
      %s25 = sadd.s32 %s18, 1
      %s26 = ssub.s32 %s18, %s25
      %p27 = scmp.eq.s32.totalorder %s26, 0
      %s29 = sadd.s32 %s28, 1
      %s30 = scalar_select %p27, %s28, %s29
      %p33 = pneg %p27
      %p34 = scmp.eq.s32.totalorder %s18, 1
      %p35 = por %p33, %p34
      %p36 = scmp.ne.s32.totalorder %s28, %s31
      %p37 = scmp.eq.s32.totalorder %s18, 0
      %p38 = por %p36, %p37
      %p39 = scmp.ne.s32.totalorder %s28, %s31
      %p40 = scmp.eq.s32.totalorder %s23, 1
      %p41 = por %p39, %p40
      %p42 = scmp.ne.s32.totalorder %s31, %s32
      %p43 = scmp.eq.s32.totalorder %s23, 0
      %p44 = por %p42, %p43
      %p45 = scmp.ne.s32.totalorder %s31, %s32
      %p46 = scmp.eq.s32.totalorder %s24, 1
      %p47 = por %p45, %p46
      %p49 = scmp.ne.s32.totalorder %s32, %s48
      %p50 = scmp.eq.s32.totalorder %s24, 0
      %p51 = por %p49, %p50
      %s53 = sadd.s32 %s52, 1
      %p56 = scmp.eq.s32.totalorder %s18, 1
      %p57 = scmp.ne.s32.totalorder %s52, %s54
      %p58 = scmp.eq.s32.totalorder %s18, 0
      %p59 = por %p57, %p58
      %p60 = scmp.ne.s32.totalorder %s52, %s54
      %p61 = scmp.eq.s32.totalorder %s23, 1
      %p62 = por %p60, %p61
      %p63 = scmp.ne.s32.totalorder %s54, %s55
      %p64 = scmp.eq.s32.totalorder %s23, 0
      %p65 = por %p63, %p64
      %p66 = scmp.ne.s32.totalorder %s54, %s55
      %p67 = scmp.eq.s32.totalorder %s24, 1
      %p68 = por %p66, %p67
      %p70 = scmp.ne.s32.totalorder %s55, %s69
      %p71 = scmp.eq.s32.totalorder %s24, 0
      %p72 = por %p70, %p71
      %s74 = sadd.s32 %s73, 1
      %p77 = scmp.eq.s32.totalorder %s18, 1
      %p78 = scmp.ne.s32.totalorder %s73, %s75
      %p79 = scmp.eq.s32.totalorder %s18, 0
      %p80 = por %p78, %p79
      %p81 = scmp.ne.s32.totalorder %s73, %s75
      %p82 = scmp.eq.s32.totalorder %s23, 1
      %p83 = por %p81, %p82
      %p84 = scmp.ne.s32.totalorder %s75, %s76
      %p85 = scmp.eq.s32.totalorder %s23, 0
      %p86 = por %p84, %p85
      %p87 = scmp.ne.s32.totalorder %s75, %s76
      %p88 = scmp.eq.s32.totalorder %s24, 1
      %p89 = por %p87, %p88
      %p91 = scmp.ne.s32.totalorder %s76, %s90
      %p92 = scmp.eq.s32.totalorder %s24, 0
      %p93 = por %p91, %p92
      %s95 = sadd.s32 %s94, 1
      %p98 = scmp.eq.s32.totalorder %s18, 1
      %p99 = scmp.ne.s32.totalorder %s94, %s96
      %p100 = scmp.eq.s32.totalorder %s18, 0
      %p101 = por %p99, %p100
      %p102 = scmp.ne.s32.totalorder %s94, %s96
      %p103 = scmp.eq.s32.totalorder %s23, 1
      %p104 = por %p102, %p103
      %p105 = scmp.ne.s32.totalorder %s96, %s97
      %p106 = scmp.eq.s32.totalorder %s23, 0
      %p107 = por %p105, %p106
      %p108 = scmp.ne.s32.totalorder %s96, %s97
      %p109 = scmp.eq.s32.totalorder %s24, 1
      %p110 = por %p108, %p109
      %p112 = scmp.ne.s32.totalorder %s97, %s111
      %p113 = scmp.eq.s32.totalorder %s24, 0
      %p114 = por %p112, %p113
      %s116 = sadd.s32 %s115, 1
      %p119 = scmp.eq.s32.totalorder %s18, 1
      %p120 = scmp.ne.s32.totalorder %s115, %s117
      %p121 = scmp.eq.s32.totalorder %s18, 0
      %p122 = por %p120, %p121
      %p123 = scmp.ne.s32.totalorder %s115, %s117
      %p124 = scmp.eq.s32.totalorder %s23, 1
      %p125 = por %p123, %p124
      %p126 = scmp.ne.s32.totalorder %s117, %s118
      %p127 = scmp.eq.s32.totalorder %s23, 0
      %p128 = por %p126, %p127
      %p129 = scmp.ne.s32.totalorder %s117, %s118
      %p130 = scmp.eq.s32.totalorder %s24, 1
      %p131 = por %p129, %p130
      %p133 = scmp.ne.s32.totalorder %s118, %s132
      %p134 = scmp.eq.s32.totalorder %s24, 0
      %p135 = por %p133, %p134
      %s137 = sadd.s32 %s136, 1
      %p140 = scmp.eq.s32.totalorder %s18, 1
      %p141 = scmp.ne.s32.totalorder %s136, %s138
      %p142 = scmp.eq.s32.totalorder %s18, 0
      %p143 = por %p141, %p142
      %p144 = scmp.ne.s32.totalorder %s136, %s138
      %p145 = scmp.eq.s32.totalorder %s23, 1
      %p146 = por %p144, %p145
      %p147 = scmp.ne.s32.totalorder %s138, %s139
      %p148 = scmp.eq.s32.totalorder %s23, 0
      %p149 = por %p147, %p148
      %p150 = scmp.ne.s32.totalorder %s138, %s139
      %p151 = scmp.eq.s32.totalorder %s24, 1
      %p152 = por %p150, %p151
      %p154 = scmp.ne.s32.totalorder %s139, %s153
      %p155 = scmp.eq.s32.totalorder %s24, 0
      %p156 = por %p154, %p155
      %s157 = ssub.s32 %s18, %s25
      %p158 = scmp.eq.s32.totalorder %s157, 0
      %s160 = sadd.s32 %s159, 1
      %s161 = scalar_select %p158, %s159, %s160
      %p164 = pneg %p158
      %p165 = scmp.eq.s32.totalorder %s18, 1
      %p166 = por %p164, %p165
      %p167 = scmp.ne.s32.totalorder %s159, %s162
      %p168 = scmp.eq.s32.totalorder %s18, 0
      %p169 = por %p167, %p168
      %p170 = scmp.ne.s32.totalorder %s159, %s162
      %p171 = scmp.eq.s32.totalorder %s23, 1
      %p172 = por %p170, %p171
      %p173 = scmp.ne.s32.totalorder %s162, %s163
      %p174 = scmp.eq.s32.totalorder %s23, 0
      %p175 = por %p173, %p174
      %p176 = scmp.ne.s32.totalorder %s162, %s163
      %p177 = scmp.eq.s32.totalorder %s24, 1
      %p178 = por %p176, %p177
      %p180 = scmp.ne.s32.totalorder %s163, %s179
      %p181 = scmp.eq.s32.totalorder %s24, 0
      %p182 = por %p180, %p181
      %p183 = scmp.le.s32.totalorder 1, %s18
      %p184 = scmp.lt.s32.totalorder %s18, 3
      %p185 = pnand %p183, %p184
      %p186 = pneg %p185
      // Predicated region
      $region9: #{tpu_custom_call.1} parent=5 // pred_check
        _
      $region10: #{tpu_custom_call.1} parent=5 // pred_check_branch
        %188 = sbr.rel (%p185) target = $region12
      $region11: #{tpu_custom_call.1} parent=5 // pred_region
        %s189 = ssub.s32 %s18, 1
        // Predicated region
        $region13: #{tpu_custom_call.1} parent=11 // pred_check
          %p190 = pneg %p65
        $region14: #{tpu_custom_call.1} parent=11 // pred_check_branch
          %192 = sbr.rel (%p190) target = $region16
        $region15: #{tpu_custom_call.1} parent=11 // pred_region
          _
        $region16: #{tpu_custom_call.1} parent=11 // pred_fallthru
          _
        // Predicated region
        $region17: #{tpu_custom_call.1} parent=11 // pred_check
          %p193 = pneg %p86
        $region18: #{tpu_custom_call.1} parent=11 // pred_check_branch
          %195 = sbr.rel (%p193) target = $region20
        $region19: #{tpu_custom_call.1} parent=11 // pred_region
          _
        $region20: #{tpu_custom_call.1} parent=11 // pred_fallthru
          _
        // Predicated region
        $region21: #{tpu_custom_call.1} parent=11 // pred_check
          %p196 = pneg %p107
        $region22: #{tpu_custom_call.1} parent=11 // pred_check_branch
          %198 = sbr.rel (%p196) target = $region24
        $region23: #{tpu_custom_call.1} parent=11 // pred_region
          _
        $region24: #{tpu_custom_call.1} parent=11 // pred_fallthru
          _
        // Predicated region
        $region25: #{tpu_custom_call.1} parent=11 // pred_check
          %p199 = pneg %p128
        $region26: #{tpu_custom_call.1} parent=11 // pred_check_branch
          %201 = sbr.rel (%p199) target = $region28
        $region27: #{tpu_custom_call.1} parent=11 // pred_region
          _
        $region28: #{tpu_custom_call.1} parent=11 // pred_fallthru
          _
        // Predicated region
        $region29: #{tpu_custom_call.1} parent=11 // pred_check
          %p202 = pneg %p149
        $region30: #{tpu_custom_call.1} parent=11 // pred_check_branch
          %204 = sbr.rel (%p202) target = $region32
        $region31: #{tpu_custom_call.1} parent=11 // pred_region
          _
        $region32: #{tpu_custom_call.1} parent=11 // pred_fallthru
          _
      $region12: #{tpu_custom_call.1} parent=5 // pred_fallthru
        _
      %p205 = scmp.lt.s32.totalorder %s18, 2
      // Predicated region
      $region33: #{tpu_custom_call.1} parent=5 // pred_check
        %p206 = pneg %p205
      $region34: #{tpu_custom_call.1} parent=5 // pred_check_branch
        %208 = sbr.rel (%p206) target = $region36
      $region35: #{tpu_custom_call.1} parent=5 // pred_region
        // Predicated region
        $region37: #{tpu_custom_call.1} parent=35 // pred_check
          %p209 = pneg %p38
        $region38: #{tpu_custom_call.1} parent=35 // pred_check_branch
          %211 = sbr.rel (%p209) target = $region40
        $region39: #{tpu_custom_call.1} parent=35 // pred_region
          %s212 = sand.u32 %s28, 1
          %s213 = scalar_lea.sflag [#allocation3], %s212
          %s214 = sand.u32 %s28, 1
          %s215 = smul.addr %s214, 8
          %s216 = scalar_lea.vmem [#allocation2], %s215
          %s218 = ssub.s32 128, 128
          %219 = vsyncadd %s213, %s218
          %s220 = smul.addr %s18, 2
          %s221 = smul.addr %s220, 64
          %s222 = scalar_lea.hbm %s0, %s221
          %s224 = sshll.u32 %s216, 4
          %s225 = int_to_ptr.vmem [resolvable:$true] %s224
          %227 = dma.hbm_to_vmem [thread:$0]  %s222, 128, %s225, %s213
        $region40: #{tpu_custom_call.1} parent=35 // pred_fallthru
          _
      $region36: #{tpu_custom_call.1} parent=5 // pred_fallthru
        _
      %p228 = scmp.le.s32.totalorder 1, %s18
      %p229 = scmp.lt.s32.totalorder %s18, 3
      %p230 = pnand %p228, %p229
      %p231 = pneg %p230
      // Predicated region
      $region41: #{tpu_custom_call.1} parent=5 // pred_check
        _
      $region42: #{tpu_custom_call.1} parent=5 // pred_check_branch
        %233 = sbr.rel (%p230) target = $region44
      $region43: #{tpu_custom_call.1} parent=5 // pred_region
        %s234 = ssub.s32 %s18, 1
        %s235 = sand.u32 %s31, 1
        %s236 = scalar_lea.sflag [#allocation3], %s235
        %s237 = sand.u32 %s31, 1
        %s238 = smul.addr %s237, 8
        %s239 = scalar_lea.vmem [#allocation2], %s238
        // Predicated region
        $region45: #{tpu_custom_call.1} parent=43 // pred_check
          %p240 = pneg %p44
        $region46: #{tpu_custom_call.1} parent=43 // pred_check_branch
          %242 = sbr.rel (%p240) target = $region48
        $region47: #{tpu_custom_call.1} parent=43 // pred_region
          %243 = dma.done %s236, 128
        $region48: #{tpu_custom_call.1} parent=43 // pred_fallthru
          _
        %s244 = sand.u32 %s31, 1
        %s245 = scalar_lea.sflag [#allocation3], %s244
        %s246 = sand.u32 %s31, 1
        %s247 = smul.addr %s246, 8
        %s248 = scalar_lea.vmem [#allocation2], %s247
        %p249 = pneg %p44
        %p250 = pneg %p41
        %p251 = pneg %p65
        %p252 = pneg %p62
        %p253 = pneg %p86
        %p254 = pneg %p83
        %p255 = pneg %p107
        %p256 = pneg %p104
        %p257 = pneg %p128
        %p258 = pneg %p125
        %p259 = pneg %p149
        %p260 = pneg %p146
        %p261 = pneg %p175
        %p262 = pneg %p172
        %s263 = sand.u32 %s162, 1
        %s264 = scalar_lea.sflag [#allocation4], %s263
        %s265 = sand.u32 %s162, 1
        %s266 = smul.addr %s265, 8
        %s267 = scalar_lea.vmem [#allocation5], %s266
        %v268 = vld [vmem:[%s239] sm:$0xff]
        %v270 = vcombine.high %v268, %v268
        %vm272 = vcmask 1043456
        %v273 = vsel %vm272, %v268, 0.0
        %v274 = vsel %vm272, %v270, 0.0
        %v275 = vadd.f32 %v273, %v274
        %276 = vadd.xlane.f32.xlu0 %v275
        %v277 = vpop.xlane.xlu0 %276
        %v278 = vmul.f32 %v277, 0.00390625
        %v279 = vld [vmem:[%s1] sm:$0x3]
        %v281 = vlaneseq
        %v282 = vshrl.u32 %v281, 7
        %v283 = vsub.s32 0, %v282
        %v284 = vrot.slane %v279, %v283
        %286 = vbcast.lane.b32.xlu0 %v284, 256
        %v287 = vpop.permute.xlu0 %286
        %v288 = vlaneseq
        %v289 = vshrl.u32 %v288, 7
        %v290 = vsub.s32 1, %v289
        %v291 = vrot.slane %v279, %v290
        %293 = vbcast.lane.b32.xlu0 %v291, 256
        %v294 = vpop.permute.xlu0 %293
        %v297 = vmul.f32 %v278, %v287
        %v298 = vmul.f32 %v278, %v294
        %301 = vset.pattern.permute.xlu0 0
        %302 = vperm.xlu0 %301, %v297
        %v303 = vpop.permute.xlu0 %302
        %304 = vset.pattern.permute.xlu0 0
        %305 = vperm.xlu0 %304, %v298
        %v306 = vpop.permute.xlu0 %305
        %v307 = vlaneseq
        %v308 = vand.u32 %v307, 127
        %v309 = vlaneseq
        %v310 = vshrl.u32 %v309, 7
        %v311 = vsub.s32 %v308, %v310
        %v312 = vrot.slane %v303, %v311
        %v313 = vlaneseq
        %v314 = vshrl.u32 %v313, 7
        %v315 = vsub.s32 %v308, %v314
        %v316 = vrot.slane %v306, %v315
        %vm317 = vcmask 1041409
        %v318 = vsel %vm317, %v316, %v312
        %vm320 = vcmask 25600
        %v321 = vsel %vm320, %v318, 0.0
        %322 = vadd.xlane.f32.xlu0 %v321
        %v323 = vpop.xlane.xlu0 %322
        %v324 = vld [vmem:[%s2] sm:$0x1]
        %v326 = vlaneseq
        %v327 = vshrl.u32 %v326, 7
        %v328 = vsub.s32 0, %v327
        %v329 = vrot.slane %v324, %v328
        %331 = vbcast.lane.b32.xlu0 %v329, 256
        %v332 = vpop.permute.xlu0 %331
        %v334 = vadd.f32 %v323, %v332
        %vm335 = vcmp.ge.f32.partialorder %v334, 0.0
        %v336 = vld [vmem:[%s3] sm:$0x1]
        %v339 = vunpack.c.l.s4 1966171168
        %v340 = vunpack.c.0.s8 %v339
        %v341 = vlaneseq
        %v342 = vshrl.u32 %v341, 7
        %v343 = vsub.s32 %v340, %v342
        %v344 = vrot.slane %v334, %v343
        %v345 = vcombine.high %v344, %v344
        %v347 = vunpack.c.l.s4 1966171168
        %v348 = vunpack.c.0.s8 %v347
        %v349 = vlaneseq
        %v350 = vshrl.u32 %v349, 7
        %v351 = vsub.s32 %v348, %v350
        %v352 = vrot.slane %v344, %v351
        %v354 = vunpack.c.l.s4 1966171168
        %v355 = vunpack.c.0.s8 %v354
        %v356 = vlaneseq
        %v357 = vshrl.u32 %v356, 7
        %v358 = vsub.s32 %v355, %v357
        %v359 = vrot.slane %v345, %v358
        %v360 = vcombine.low %v352, %v359
        %v362 = vunpack.c.l.s4 1966171168
        %v363 = vunpack.c.0.s8 %v362
        %v364 = vlaneseq
        %v365 = vshrl.u32 %v364, 7
        %v366 = vsub.s32 %v363, %v365
        %v367 = vrot.slane %v360, %v366
        %v369 = vunpack.c.l.s4 1966171168
        %v370 = vunpack.c.0.s8 %v369
        %v371 = vlaneseq
        %v372 = vshrl.u32 %v371, 7
        %v373 = vsub.s32 %v370, %v372
        %v374 = vrot.slane %v367, %v373
        %375 = vset.pattern.permute.xlu0 0
        %376 = vperm.xlu0 %375, %v374
        %v377 = vpop.permute.xlu0 %376
        %v378 = vlaneseq
        %v379 = vshrl.u32 %v378, 7
        %v380 = vsub.s32 %v308, %v379
        %v381 = vrot.slane %v377, %v380
        %v383 = vunpack.c.l.s4 1966171168
        %v384 = vunpack.c.0.s8 %v383
        %v385 = vlaneseq
        %v386 = vshrl.u32 %v385, 7
        %v387 = vsub.s32 %v384, %v386
        %v388 = vrot.slane %v381, %v387
        %v390 = vunpack.c.l.s4 1966171168
        %v391 = vunpack.c.0.s8 %v390
        %v392 = vlaneseq
        %v393 = vshrl.u32 %v392, 7
        %v394 = vsub.s32 %v391, %v393
        %v395 = vrot.slane %v388, %v394
        %v397 = vmul.f32 %v336, %v395
        %v399 = vlaneseq
        %v400 = vshrl.u32 %v399, 7
        %v401 = vsub.s32 0, %v400
        %v402 = vrot.slane %v397, %v401
        %404 = vbcast.lane.b32.xlu0 %v402, 256
        %v405 = vpop.permute.xlu0 %404
        %v407 = vsel %vm335, %v334, %v405
        %v408 = vld [vmem:[%s4] sm:$0xf]
        %v410 = vlaneseq
        %v411 = vshrl.u32 %v410, 7
        %v412 = vsub.s32 0, %v411
        %v413 = vrot.slane %v408, %v412
        %415 = vbcast.lane.b32.xlu0 %v413, 256
        %v416 = vpop.permute.xlu0 %415
        %v417 = vlaneseq
        %v418 = vshrl.u32 %v417, 7
        %v419 = vsub.s32 1, %v418
        %v420 = vrot.slane %v408, %v419
        %422 = vbcast.lane.b32.xlu0 %v420, 256
        %v423 = vpop.permute.xlu0 %422
        %v424 = vlaneseq
        %v425 = vshrl.u32 %v424, 7
        %v426 = vsub.s32 2, %v425
        %v427 = vrot.slane %v408, %v426
        %429 = vbcast.lane.b32.xlu0 %v427, 256
        %v430 = vpop.permute.xlu0 %429
        %v431 = vlaneseq
        %v432 = vshrl.u32 %v431, 7
        %v433 = vsub.s32 3, %v432
        %v434 = vrot.slane %v408, %v433
        %436 = vbcast.lane.b32.xlu0 %v434, 256
        %v437 = vpop.permute.xlu0 %436
        %v442 = vmul.f32 %v407, %v416
        %v443 = vmul.f32 %v407, %v423
        %v444 = vmul.f32 %v407, %v430
        %v445 = vmul.f32 %v407, %v437
        %450 = vset.pattern.permute.xlu0 0
        %451 = vperm.xlu0 %450, %v442
        %v452 = vpop.permute.xlu0 %451
        %453 = vset.pattern.permute.xlu0 0
        %454 = vperm.xlu0 %453, %v443
        %v455 = vpop.permute.xlu0 %454
        %456 = vset.pattern.permute.xlu0 0
        %457 = vperm.xlu0 %456, %v444
        %v458 = vpop.permute.xlu0 %457
        %459 = vset.pattern.permute.xlu0 0
        %460 = vperm.xlu0 %459, %v445
        %v461 = vpop.permute.xlu0 %460
        %v462 = vlaneseq
        %v463 = vshrl.u32 %v462, 7
        %v464 = vsub.s32 %v308, %v463
        %v465 = vrot.slane %v452, %v464
        %v466 = vlaneseq
        %v467 = vshrl.u32 %v466, 7
        %v468 = vsub.s32 %v308, %v467
        %v469 = vrot.slane %v455, %v468
        %v470 = vlaneseq
        %v471 = vshrl.u32 %v470, 7
        %v472 = vsub.s32 %v308, %v471
        %v473 = vrot.slane %v458, %v472
        %v474 = vlaneseq
        %v475 = vshrl.u32 %v474, 7
        %v476 = vsub.s32 %v308, %v475
        %v477 = vrot.slane %v461, %v476
        %v478 = vsel %vm317, %v469, %v465
        %vm479 = vcmask 1042434
        %v480 = vsel %vm479, %v473, %v478
        %vm481 = vcmask 1043459
        %v482 = vsel %vm481, %v477, %v480
        %vm484 = vcmask 11264
        %v485 = vsel %vm484, %v482, 0.0
        %486 = vadd.xlane.f32.xlu0 %v485
        %v487 = vpop.xlane.xlu0 %486
        %v488 = vld [vmem:[%s5] sm:$0x1]
        %v490 = vlaneseq
        %v491 = vshrl.u32 %v490, 7
        %v492 = vsub.s32 0, %v491
        %v493 = vrot.slane %v488, %v492
        %495 = vbcast.lane.b32.xlu0 %v493, 256
        %v496 = vpop.permute.xlu0 %495
        %v498 = vadd.f32 %v487, %v496
        %v499 = vxor.u32 %v498, 2147483648
        %v500 = vmul.f32 %v499, 1.442695
        %v501 = vpow.pop %v500
        %v502 = vadd.f32 %v501, 1.0
        %v503 = vrcp.pop %v502
        %v504 = vmul.f32 1.0, %v503
        %506 = vset.pattern.permute.xlu0 0
        %507 = vperm.xlu0 %506, %v504
        %v508 = vpop.permute.xlu0 %507
        %v510 = vunpack.c.l.s4 839922192
        %v511 = vunpack.c.0.s8 %v510
        %v512 = vlaneseq
        %v513 = vshrl.u32 %v512, 7
        %v514 = vsub.s32 %v511, %v513
        %v515 = vrot.slane %v508, %v514
        %v517 = vmul.f32 %v268, %v515
        %518 = vst [vmem:[%s267] sm:$0xff] %v517
        %s519 = sand.u32 %s162, 1
        %s520 = scalar_lea.sflag [#allocation4], %s519
        %s521 = sand.u32 %s162, 1
        %s522 = smul.addr %s521, 8
        %s523 = scalar_lea.vmem [#allocation5], %s522
        // Predicated region
        $region49: #{tpu_custom_call.1} parent=43 // pred_check
          %p524 = pneg %p172
        $region50: #{tpu_custom_call.1} parent=43 // pred_check_branch
          %526 = sbr.rel (%p524) target = $region52
        $region51: #{tpu_custom_call.1} parent=43 // pred_region
          %s528 = ssub.s32 128, 128
          %529 = vsyncadd %s520, %s528
          %s530 = smul.addr %s23, 2
          %s531 = smul.addr %s530, 64
          %s532 = scalar_lea.hbm %s6, %s531
          %s534 = sshll.u32 %s523, 4
          %s535 = int_to_ptr.vmem [resolvable:$true] %s534
          %537 = dma.vmem_to_hbm [thread:$0]  %s535, 128, %s532, %s520
        $region52: #{tpu_custom_call.1} parent=43 // pred_fallthru
          _
      $region44: #{tpu_custom_call.1} parent=5 // pred_fallthru
        _
      %p538 = scmp.le.s32.totalorder 2, %s18
      // Predicated region
      $region53: #{tpu_custom_call.1} parent=5 // pred_check
        %p539 = pneg %p538
      $region54: #{tpu_custom_call.1} parent=5 // pred_check_branch
        %541 = sbr.rel (%p539) target = $region56
      $region55: #{tpu_custom_call.1} parent=5 // pred_region
        %s542 = ssub.s32 %s18, 2
        // Predicated region
        $region57: #{tpu_custom_call.1} parent=55 // pred_check
          %p543 = pneg %p178
        $region58: #{tpu_custom_call.1} parent=55 // pred_check_branch
          %545 = sbr.rel (%p543) target = $region60
        $region59: #{tpu_custom_call.1} parent=55 // pred_region
          %s546 = sand.u32 %s163, 1
          %s547 = scalar_lea.sflag [#allocation4], %s546
          %s548 = sand.u32 %s163, 1
          %s549 = smul.addr %s548, 8
          %s550 = scalar_lea.vmem [#allocation5], %s549
          %551 = dma.done %s547, 128
        $region60: #{tpu_custom_call.1} parent=55 // pred_fallthru
          _
      $region56: #{tpu_custom_call.1} parent=5 // pred_fallthru
        _
    $region6: #{tpu_custom_call.1} parent=1 // loop_footer
      %s22 = sadd.s32 1, %s18
    $region7: #{tpu_custom_call.1} parent=1 // loop_footer_branch
      %17 = sbr.rel target = $region3
    $region8: #{tpu_custom_call.1} parent=1 // loop_exit
      _
    %552 = vsyncpa [#allocation3], 1
    %s553 = scalar_lea.sflag [#allocation3], 1
    %554 = vsyncpa %s553, 1
    %555 = vsyncpa [#allocation4], 1
    %s556 = scalar_lea.sflag [#allocation4], 1
    %557 = vsyncpa %s556, 1

</llo_original>
